<compile_context>
chip_gen: v6e
topology: v6e:2x2x1
jax: 0.10.0
libtpu: 0.0.40
codegen_flags: <defaults>
</compile_context>

<pallas_src>
import functools
import math

import jax
import jax.numpy as jnp
from jax import lax
from jax.experimental import pallas as pl
from jax.experimental.pallas import tpu as pltpu


# ----------------------------------------------------------------------------
# Fused Pallas kernel: one batch element per grid step.
# ----------------------------------------------------------------------------
def _fused_attention_kernel(x_ref, wqkv_ref, wout_ref, bout_ref, o_ref, qkv_scr,
                            *, heads, dim_head, scale):
    # x_ref:    (1, N, dim)   one batch element
    # wqkv_ref: (dim, 3*inner)
    # wout_ref: (inner, dim)
    # bout_ref: (1, dim)
    # o_ref:    (1, N, dim)
    # qkv_scr:  VMEM scratch (N, 3*inner) bf16
    N = x_ref.shape[1]
    dim = x_ref.shape[2]
    inner = heads * dim_head

    # (1) QKV projection: bf16 operands on the MXU, f32 accumulation.
    qkv_f32 = jnp.dot(
        x_ref[0].astype(jnp.bfloat16),
        wqkv_ref[...].astype(jnp.bfloat16),
        preferred_element_type=jnp.float32,
    )  # (N, 3*inner) f32

    # Fold the attention scale into the q columns while still in f32 (one
    # full-width VPU select+mul), then keep qkv resident in VMEM as bf16 so the
    # per-head MXU operands need no further casts.
    col = lax.broadcasted_iota(jnp.int32, (N, 3 * inner), 1)
    q_scale = jnp.where(col < inner, jnp.float32(scale), jnp.float32(1.0))
    qkv_scr[...] = (qkv_f32 * q_scale).astype(jnp.bfloat16)

    # (2) Per-head attention; head-concat folded into the output projection.
    #     `heads` is small & static -> fully unrolled, all slices are static.
    acc = jnp.zeros((N, dim), jnp.float32)
    for h in range(heads):
        lo = h * dim_head

        q_h = qkv_scr[:, lo:lo + dim_head]                           # (N, Dh) bf16, pre-scaled
        k_h = qkv_scr[:, inner + lo:inner + lo + dim_head]           # (N, Dh) bf16
        v_h = qkv_scr[:, 2 * inner + lo:2 * inner + lo + dim_head]   # (N, Dh) bf16

        # scores = (q*scale) @ k^T via dot_general contracting last dims
        # (no XLU transpose of k).
        s = lax.dot_general(
            q_h, k_h,
            dimension_numbers=(((1,), (1,)), ((), ())),
            preferred_element_type=jnp.float32,
        )  # (N, N) f32

        # Numerically-stable softmax in f32 (matches nn.Softmax(dim=-1)).
        m = jnp.max(s, axis=-1, keepdims=True)
        e = jnp.exp(s - m)                                           # EUP
        p = e * pl.reciprocal(jnp.sum(e, axis=-1, keepdims=True), approx=True)

        head_out = jnp.dot(
            p.astype(jnp.bfloat16), v_h,
            preferred_element_type=jnp.float32,
        )  # (N, Dh)

        # Output projection contribution of this head:
        #   concat_h(head_out_h) @ W_out == sum_h head_out_h @ W_out[lo:lo+Dh, :]
        w_out_h = wout_ref[lo:lo + dim_head, :].astype(jnp.bfloat16)  # (Dh, dim)
        acc = acc + jnp.dot(
            head_out.astype(jnp.bfloat16), w_out_h,
            preferred_element_type=jnp.float32,
        )

    # (3) Bias folded into the kernel; Dropout(p=0.0) is identity.
    o_ref[0] = (acc + bout_ref[...]).astype(o_ref.dtype)


# ----------------------------------------------------------------------------
# Module-equivalent forward: a single fused pallas_call.
# ----------------------------------------------------------------------------
def attention_forward(x, params, heads, dim_head):
    B, N, dim = x.shape
    inner = heads * dim_head
    scale = dim_head ** (-0.5)

    w_qkv = params["w_qkv"]                  # (dim, 3*inner)
    w_out = params["w_out"]                  # (inner, dim)
    b_out = params["b_out"].reshape(1, dim)  # (1, dim)

    kernel = functools.partial(
        _fused_attention_kernel, heads=heads, dim_head=dim_head, scale=scale
    )

    flops = (
        2 * B * N * dim * (3 * inner)            # QKV projection
        + 2 * B * heads * N * N * dim_head * 2   # scores + attn@v
        + 2 * B * N * inner * dim                # output projection
    )
    bytes_accessed = 4 * (x.size + w_qkv.size + w_out.size + b_out.size + B * N * dim)
    cost = pl.CostEstimate(
        flops=flops,
        transcendentals=B * heads * N * N,       # exp in softmax
        bytes_accessed=bytes_accessed,
    )

    return pl.pallas_call(
        kernel,
        out_shape=jax.ShapeDtypeStruct((B, N, dim), x.dtype),
        grid=(B,),
        in_specs=[
            pl.BlockSpec((1, N, dim), lambda b: (b, 0, 0)),         # x (per batch)
            pl.BlockSpec((dim, 3 * inner), lambda b: (0, 0)),       # w_qkv (resident)
            pl.BlockSpec((inner, dim), lambda b: (0, 0)),           # w_out (resident)
            pl.BlockSpec((1, dim), lambda b: (0, 0)),               # b_out (resident)
        ],
        out_specs=pl.BlockSpec((1, N, dim), lambda b: (b, 0, 0)),
        scratch_shapes=[pltpu.VMEM((N, 3 * inner), jnp.bfloat16)],  # qkv stays in VMEM
        compiler_params=pltpu.CompilerParams(
            dimension_semantics=("parallel",),                      # 2 TCs on v7x
        ),
        cost_estimate=cost,
    )(x, w_qkv, w_out, b_out)


def init_params(key, dim, heads, dim_head):
    inner_dim = heads * dim_head
    k1, k2, k3 = jax.random.split(key, 3)
    # Deterministic init (PyTorch-Linear-like uniform bounds); weights stored
    # pre-transposed as (in, out) so the kernel computes x @ W.
    b_qkv = 1.0 / math.sqrt(dim)
    b_out = 1.0 / math.sqrt(inner_dim)
    return {
        "w_qkv": jax.random.uniform(
            k1, (dim, inner_dim * 3), jnp.float32, -b_qkv, b_qkv
        ),
        "w_out": jax.random.uniform(
            k2, (inner_dim, dim), jnp.float32, -b_out, b_out
        ),
        "b_out": jax.random.uniform(k3, (dim,), jnp.float32, -b_out, b_out),
    }


# ----------------------------------------------------------------------------
# Pure-JAX reference (f32) for correctness check.
# ----------------------------------------------------------------------------
def attention_reference(x, params, heads, dim_head):
    B, N, dim = x.shape
    inner_dim = heads * dim_head
    scale = dim_head ** (-0.5)
    qkv = x @ params["w_qkv"]
    q, k, v = jnp.split(qkv, 3, axis=-1)
    to_heads = lambda t: jnp.transpose(
        t.reshape(B, N, heads, dim_head), (0, 2, 1, 3)
    )
    q, k, v = map(to_heads, (q, k, v))
    dots = jnp.einsum("bhnd,bhmd->bhnm", q, k) * scale
    attn = jax.nn.softmax(dots, axis=-1)
    out = jnp.einsum("bhnm,bhmd->bhnd", attn, v)
    out = jnp.transpose(out, (0, 2, 1, 3)).reshape(B, N, inner_dim)
    return out @ params["w_out"] + params["b_out"]


if __name__ == "__main__":
    # Small shapes consistent with the module: batch=2, seq=8, dim=32,
    # heads=4, dim_head=8 (inner_dim = 32).
    B, N, dim = 2, 8, 32
    heads, dim_head = 4, 8

    key = jax.random.PRNGKey(0)
    kx, kp = jax.random.split(key)
    x = jax.random.normal(kx, (B, N, dim), jnp.float32)
    params = init_params(kp, dim, heads, dim_head)

    fwd = jax.jit(functools.partial(attention_forward, heads=heads, dim_head=dim_head))
    out = jax.block_until_ready(fwd(x, params))

    ref = attention_reference(x, params, heads, dim_head)
    assert out.shape == (B, N, dim)
    # bf16 MXU operands with f32 accumulation + EUP approx reciprocal -> relaxed
    # tolerance vs the pure-f32 reference.
    assert jnp.allclose(out, ref, atol=3e-2, rtol=3e-2), (
        "mismatch vs reference: max abs err = "
        f"{float(jnp.max(jnp.abs(out - ref)))}"
    )

    print("KERNEL_OK")
</pallas_src>

<mosaic_0001>
module attributes {stable_mosaic.version = 11 : i64} {
  func.func @_fused_attention_kernel(%arg0: i32, %arg1: memref<1x8x32xf32, #tpu.memory_space<vmem>>, %arg2: memref<32x96xf32, #tpu.memory_space<vmem>>, %arg3: memref<32x32xf32, #tpu.memory_space<vmem>>, %arg4: memref<1x32xf32, #tpu.memory_space<vmem>>, %arg5: memref<1x8x32xf32, #tpu.memory_space<vmem>>, %arg6: memref<8x96xbf16, #tpu.memory_space<vmem>>) attributes {dimension_semantics = [#tpu.dimension_semantics<parallel>], iteration_bounds = array<i64: 2>, scalar_prefetch = 0 : i64, scratch_operands = 1 : i64, tpu.core_type = #tpu.core_type<tc>, window_params = [{transform_indices = @transform_0, window_bounds = array<i64: 1, 8, 32>}, {pipeline_mode = #tpu.pipeline_mode<synchronous>, transform_indices = @transform_1, window_bounds = array<i64: 32, 96>}, {pipeline_mode = #tpu.pipeline_mode<synchronous>, transform_indices = @transform_2, window_bounds = array<i64: 32, 32>}, {pipeline_mode = #tpu.pipeline_mode<synchronous>, transform_indices = @transform_3, window_bounds = array<i64: 1, 32>}, {transform_indices = @transform_4, window_bounds = array<i64: 1, 8, 32>}]} {
    %c0 = arith.constant 0 : index
    %c0_0 = arith.constant 0 : index
    %c0_1 = arith.constant 0 : index
    %0 = vector.load %arg1[%c0, %c0_0, %c0_1] : memref<1x8x32xf32, #tpu.memory_space<vmem>>, vector<1x8x32xf32>
    %1 = vector.shape_cast %0 : vector<1x8x32xf32> to vector<8x32xf32>
    %2 = arith.truncf %1 : vector<8x32xf32> to vector<8x32xbf16>
    %c0_2 = arith.constant 0 : index
    %c0_3 = arith.constant 0 : index
    %3 = vector.load %arg2[%c0_2, %c0_3] : memref<32x96xf32, #tpu.memory_space<vmem>>, vector<32x96xf32>
    %4 = arith.truncf %3 : vector<32x96xf32> to vector<32x96xbf16>
    %cst = arith.constant dense<0.000000e+00> : vector<8x96xf32>
    %5 = tpu.matmul %2, %4, %cst {dimension_numbers = #tpu.dot_dimension_numbers<[1], [0], [0], [1], [0, 0, 1, 1], [], []>} : vector<8x32xbf16>, vector<32x96xbf16>, vector<8x96xf32> -> vector<8x96xf32>
    %6 = tpu.iota {dimensions = array<i32: 1>} : vector<8x96xi32>
    %c32_i32 = arith.constant 32 : i32
    %7 = vector.broadcast %c32_i32 : i32 to vector<8x96xi32>
    %8 = arith.cmpi slt, %6, %7 : vector<8x96xi32>
    %cst_4 = arith.constant 0.353553385 : f32
    %cst_5 = arith.constant 1.000000e+00 : f32
    %9 = vector.broadcast %cst_4 : f32 to vector<8x96xf32>
    %10 = vector.broadcast %cst_5 : f32 to vector<8x96xf32>
    %11 = arith.select %8, %9, %10 : vector<8x96xi1>, vector<8x96xf32>
    %12 = arith.mulf %5, %11 : vector<8x96xf32>
    %13 = arith.truncf %12 : vector<8x96xf32> to vector<8x96xbf16>
    %c0_6 = arith.constant 0 : index
    %c0_7 = arith.constant 0 : index
    %14 = vector.load %arg6[%c0_6, %c0_7] : memref<8x96xbf16, #tpu.memory_space<vmem>>, vector<8x96xbf16>
    tpu.vector_store %arg6[%c0_6, %c0_7], %13 {strides = array<i32>} : memref<8x96xbf16, #tpu.memory_space<vmem>>, vector<8x96xbf16>,
    %cst_8 = arith.constant 0.000000e+00 : f32
    %15 = vector.broadcast %cst_8 : f32 to vector<8x32xf32>
    %c0_9 = arith.constant 0 : index
    %c0_10 = arith.constant 0 : index
    %16 = vector.load %arg6[%c0_9, %c0_10] : memref<8x96xbf16, #tpu.memory_space<vmem>>, vector<8x8xbf16>
    %c0_11 = arith.constant 0 : index
    %c32 = arith.constant 32 : index
    %17 = vector.load %arg6[%c0_11, %c32] : memref<8x96xbf16, #tpu.memory_space<vmem>>, vector<8x8xbf16>
    %c0_12 = arith.constant 0 : index
    %c64 = arith.constant 64 : index
    %18 = vector.load %arg6[%c0_12, %c64] : memref<8x96xbf16, #tpu.memory_space<vmem>>, vector<8x8xbf16>
    %cst_13 = arith.constant dense<0.000000e+00> : vector<8x8xf32>
    %19 = tpu.matmul %16, %17, %cst_13 {dimension_numbers = #tpu.dot_dimension_numbers<[1], [1], [0], [0], [0, 0, 1, 0], [], []>} : vector<8x8xbf16>, vector<8x8xbf16>, vector<8x8xf32> -> vector<8x8xf32>
    %cst_14 = arith.constant dense<0xFF800000> : vector<8xf32>
    %20 = vector.multi_reduction <maximumf>, %19, %cst_14 [1] : vector<8x8xf32> to vector<8xf32>
    %21 = vector.shape_cast %20 : vector<8xf32> to vector<8x1xf32>
    %22 = vector.broadcast %21 : vector<8x1xf32> to vector<8x8xf32>
    %23 = arith.subf %19, %22 : vector<8x8xf32>
    %24 = math.exp %23 : vector<8x8xf32>
    %cst_15 = arith.constant dense<0.000000e+00> : vector<8xf32>
    %25 = vector.multi_reduction <add>, %24, %cst_15 [1] : vector<8x8xf32> to vector<8xf32>
    %26 = vector.shape_cast %25 : vector<8xf32> to vector<8x1xf32>
    %27 = tpu.reciprocal %26 {approx = true} : vector<8x1xf32> -> vector<8x1xf32>
    %28 = vector.broadcast %27 : vector<8x1xf32> to vector<8x8xf32>
    %29 = arith.mulf %24, %28 : vector<8x8xf32>
    %30 = arith.truncf %29 : vector<8x8xf32> to vector<8x8xbf16>
    %cst_16 = arith.constant dense<0.000000e+00> : vector<8x8xf32>
    %31 = tpu.matmul %30, %18, %cst_16 {dimension_numbers = #tpu.dot_dimension_numbers<[1], [0], [0], [1], [0, 0, 1, 1], [], []>} : vector<8x8xbf16>, vector<8x8xbf16>, vector<8x8xf32> -> vector<8x8xf32>
    %c0_17 = arith.constant 0 : index
    %c0_18 = arith.constant 0 : index
    %32 = vector.load %arg3[%c0_17, %c0_18] : memref<32x32xf32, #tpu.memory_space<vmem>>, vector<8x32xf32>
    %33 = arith.truncf %32 : vector<8x32xf32> to vector<8x32xbf16>
    %34 = arith.truncf %31 : vector<8x8xf32> to vector<8x8xbf16>
    %cst_19 = arith.constant dense<0.000000e+00> : vector<8x32xf32>
    %35 = tpu.matmul %34, %33, %cst_19 {dimension_numbers = #tpu.dot_dimension_numbers<[1], [0], [0], [1], [0, 0, 1, 1], [], []>} : vector<8x8xbf16>, vector<8x32xbf16>, vector<8x32xf32> -> vector<8x32xf32>
    %36 = arith.addf %15, %35 : vector<8x32xf32>
    %c0_20 = arith.constant 0 : index
    %c8 = arith.constant 8 : index
    %37 = vector.load %arg6[%c0_20, %c8] : memref<8x96xbf16, #tpu.memory_space<vmem>>, vector<8x8xbf16>
    %c0_21 = arith.constant 0 : index
    %c40 = arith.constant 40 : index
    %38 = vector.load %arg6[%c0_21, %c40] : memref<8x96xbf16, #tpu.memory_space<vmem>>, vector<8x8xbf16>
    %c0_22 = arith.constant 0 : index
    %c72 = arith.constant 72 : index
    %39 = vector.load %arg6[%c0_22, %c72] : memref<8x96xbf16, #tpu.memory_space<vmem>>, vector<8x8xbf16>
    %cst_23 = arith.constant dense<0.000000e+00> : vector<8x8xf32>
    %40 = tpu.matmul %37, %38, %cst_23 {dimension_numbers = #tpu.dot_dimension_numbers<[1], [1], [0], [0], [0, 0, 1, 0], [], []>} : vector<8x8xbf16>, vector<8x8xbf16>, vector<8x8xf32> -> vector<8x8xf32>
    %cst_24 = arith.constant dense<0xFF800000> : vector<8xf32>
    %41 = vector.multi_reduction <maximumf>, %40, %cst_24 [1] : vector<8x8xf32> to vector<8xf32>
    %42 = vector.shape_cast %41 : vector<8xf32> to vector<8x1xf32>
    %43 = vector.broadcast %42 : vector<8x1xf32> to vector<8x8xf32>
    %44 = arith.subf %40, %43 : vector<8x8xf32>
    %45 = math.exp %44 : vector<8x8xf32>
    %cst_25 = arith.constant dense<0.000000e+00> : vector<8xf32>
    %46 = vector.multi_reduction <add>, %45, %cst_25 [1] : vector<8x8xf32> to vector<8xf32>
    %47 = vector.shape_cast %46 : vector<8xf32> to vector<8x1xf32>
    %48 = tpu.reciprocal %47 {approx = true} : vector<8x1xf32> -> vector<8x1xf32>
    %49 = vector.broadcast %48 : vector<8x1xf32> to vector<8x8xf32>
    %50 = arith.mulf %45, %49 : vector<8x8xf32>
    %51 = arith.truncf %50 : vector<8x8xf32> to vector<8x8xbf16>
    %cst_26 = arith.constant dense<0.000000e+00> : vector<8x8xf32>
    %52 = tpu.matmul %51, %39, %cst_26 {dimension_numbers = #tpu.dot_dimension_numbers<[1], [0], [0], [1], [0, 0, 1, 1], [], []>} : vector<8x8xbf16>, vector<8x8xbf16>, vector<8x8xf32> -> vector<8x8xf32>
    %c8_27 = arith.constant 8 : index
    %c0_28 = arith.constant 0 : index
    %53 = vector.load %arg3[%c8_27, %c0_28] : memref<32x32xf32, #tpu.memory_space<vmem>>, vector<8x32xf32>
    %54 = arith.truncf %53 : vector<8x32xf32> to vector<8x32xbf16>
    %55 = arith.truncf %52 : vector<8x8xf32> to vector<8x8xbf16>
    %cst_29 = arith.constant dense<0.000000e+00> : vector<8x32xf32>
    %56 = tpu.matmul %55, %54, %cst_29 {dimension_numbers = #tpu.dot_dimension_numbers<[1], [0], [0], [1], [0, 0, 1, 1], [], []>} : vector<8x8xbf16>, vector<8x32xbf16>, vector<8x32xf32> -> vector<8x32xf32>
    %57 = arith.addf %36, %56 : vector<8x32xf32>
    %c0_30 = arith.constant 0 : index
    %c16 = arith.constant 16 : index
    %58 = vector.load %arg6[%c0_30, %c16] : memref<8x96xbf16, #tpu.memory_space<vmem>>, vector<8x8xbf16>
    %c0_31 = arith.constant 0 : index
    %c48 = arith.constant 48 : index
    %59 = vector.load %arg6[%c0_31, %c48] : memref<8x96xbf16, #tpu.memory_space<vmem>>, vector<8x8xbf16>
    %c0_32 = arith.constant 0 : index
    %c80 = arith.constant 80 : index
    %60 = vector.load %arg6[%c0_32, %c80] : memref<8x96xbf16, #tpu.memory_space<vmem>>, vector<8x8xbf16>
    %cst_33 = arith.constant dense<0.000000e+00> : vector<8x8xf32>
    %61 = tpu.matmul %58, %59, %cst_33 {dimension_numbers = #tpu.dot_dimension_numbers<[1], [1], [0], [0], [0, 0, 1, 0], [], []>} : vector<8x8xbf16>, vector<8x8xbf16>, vector<8x8xf32> -> vector<8x8xf32>
    %cst_34 = arith.constant dense<0xFF800000> : vector<8xf32>
    %62 = vector.multi_reduction <maximumf>, %61, %cst_34 [1] : vector<8x8xf32> to vector<8xf32>
    %63 = vector.shape_cast %62 : vector<8xf32> to vector<8x1xf32>
    %64 = vector.broadcast %63 : vector<8x1xf32> to vector<8x8xf32>
    %65 = arith.subf %61, %64 : vector<8x8xf32>
    %66 = math.exp %65 : vector<8x8xf32>
    %cst_35 = arith.constant dense<0.000000e+00> : vector<8xf32>
    %67 = vector.multi_reduction <add>, %66, %cst_35 [1] : vector<8x8xf32> to vector<8xf32>
    %68 = vector.shape_cast %67 : vector<8xf32> to vector<8x1xf32>
    %69 = tpu.reciprocal %68 {approx = true} : vector<8x1xf32> -> vector<8x1xf32>
    %70 = vector.broadcast %69 : vector<8x1xf32> to vector<8x8xf32>
    %71 = arith.mulf %66, %70 : vector<8x8xf32>
    %72 = arith.truncf %71 : vector<8x8xf32> to vector<8x8xbf16>
    %cst_36 = arith.constant dense<0.000000e+00> : vector<8x8xf32>
    %73 = tpu.matmul %72, %60, %cst_36 {dimension_numbers = #tpu.dot_dimension_numbers<[1], [0], [0], [1], [0, 0, 1, 1], [], []>} : vector<8x8xbf16>, vector<8x8xbf16>, vector<8x8xf32> -> vector<8x8xf32>
    %c16_37 = arith.constant 16 : index
    %c0_38 = arith.constant 0 : index
    %74 = vector.load %arg3[%c16_37, %c0_38] : memref<32x32xf32, #tpu.memory_space<vmem>>, vector<8x32xf32>
    %75 = arith.truncf %74 : vector<8x32xf32> to vector<8x32xbf16>
    %76 = arith.truncf %73 : vector<8x8xf32> to vector<8x8xbf16>
    %cst_39 = arith.constant dense<0.000000e+00> : vector<8x32xf32>
    %77 = tpu.matmul %76, %75, %cst_39 {dimension_numbers = #tpu.dot_dimension_numbers<[1], [0], [0], [1], [0, 0, 1, 1], [], []>} : vector<8x8xbf16>, vector<8x32xbf16>, vector<8x32xf32> -> vector<8x32xf32>
    %78 = arith.addf %57, %77 : vector<8x32xf32>
    %c0_40 = arith.constant 0 : index
    %c24 = arith.constant 24 : index
    %79 = vector.load %arg6[%c0_40, %c24] : memref<8x96xbf16, #tpu.memory_space<vmem>>, vector<8x8xbf16>
    %c0_41 = arith.constant 0 : index
    %c56 = arith.constant 56 : index
    %80 = vector.load %arg6[%c0_41, %c56] : memref<8x96xbf16, #tpu.memory_space<vmem>>, vector<8x8xbf16>
    %c0_42 = arith.constant 0 : index
    %c88 = arith.constant 88 : index
    %81 = vector.load %arg6[%c0_42, %c88] : memref<8x96xbf16, #tpu.memory_space<vmem>>, vector<8x8xbf16>
    %cst_43 = arith.constant dense<0.000000e+00> : vector<8x8xf32>
    %82 = tpu.matmul %79, %80, %cst_43 {dimension_numbers = #tpu.dot_dimension_numbers<[1], [1], [0], [0], [0, 0, 1, 0], [], []>} : vector<8x8xbf16>, vector<8x8xbf16>, vector<8x8xf32> -> vector<8x8xf32>
    %cst_44 = arith.constant dense<0xFF800000> : vector<8xf32>
    %83 = vector.multi_reduction <maximumf>, %82, %cst_44 [1] : vector<8x8xf32> to vector<8xf32>
    %84 = vector.shape_cast %83 : vector<8xf32> to vector<8x1xf32>
    %85 = vector.broadcast %84 : vector<8x1xf32> to vector<8x8xf32>
    %86 = arith.subf %82, %85 : vector<8x8xf32>
    %87 = math.exp %86 : vector<8x8xf32>
    %cst_45 = arith.constant dense<0.000000e+00> : vector<8xf32>
    %88 = vector.multi_reduction <add>, %87, %cst_45 [1] : vector<8x8xf32> to vector<8xf32>
    %89 = vector.shape_cast %88 : vector<8xf32> to vector<8x1xf32>
    %90 = tpu.reciprocal %89 {approx = true} : vector<8x1xf32> -> vector<8x1xf32>
    %91 = vector.broadcast %90 : vector<8x1xf32> to vector<8x8xf32>
    %92 = arith.mulf %87, %91 : vector<8x8xf32>
    %93 = arith.truncf %92 : vector<8x8xf32> to vector<8x8xbf16>
    %cst_46 = arith.constant dense<0.000000e+00> : vector<8x8xf32>
    %94 = tpu.matmul %93, %81, %cst_46 {dimension_numbers = #tpu.dot_dimension_numbers<[1], [0], [0], [1], [0, 0, 1, 1], [], []>} : vector<8x8xbf16>, vector<8x8xbf16>, vector<8x8xf32> -> vector<8x8xf32>
    %c24_47 = arith.constant 24 : index
    %c0_48 = arith.constant 0 : index
    %95 = vector.load %arg3[%c24_47, %c0_48] : memref<32x32xf32, #tpu.memory_space<vmem>>, vector<8x32xf32>
    %96 = arith.truncf %95 : vector<8x32xf32> to vector<8x32xbf16>
    %97 = arith.truncf %94 : vector<8x8xf32> to vector<8x8xbf16>
    %cst_49 = arith.constant dense<0.000000e+00> : vector<8x32xf32>
    %98 = tpu.matmul %97, %96, %cst_49 {dimension_numbers = #tpu.dot_dimension_numbers<[1], [0], [0], [1], [0, 0, 1, 1], [], []>} : vector<8x8xbf16>, vector<8x32xbf16>, vector<8x32xf32> -> vector<8x32xf32>
    %99 = arith.addf %78, %98 : vector<8x32xf32>
    %c0_50 = arith.constant 0 : index
    %c0_51 = arith.constant 0 : index
    %100 = vector.load %arg4[%c0_50, %c0_51] : memref<1x32xf32, #tpu.memory_space<vmem>>, vector<1x32xf32>
    %101 = vector.broadcast %100 : vector<1x32xf32> to vector<8x32xf32>
    %102 = arith.addf %99, %101 : vector<8x32xf32>
    %c0_52 = arith.constant 0 : index
    %c0_53 = arith.constant 0 : index
    %c0_54 = arith.constant 0 : index
    %103 = vector.load %arg5[%c0_52, %c0_53, %c0_54] : memref<1x8x32xf32, #tpu.memory_space<vmem>>, vector<1x8x32xf32>
    %104 = vector.shape_cast %103 : vector<1x8x32xf32> to vector<8x32xf32>
    %105 = vector.shape_cast %102 : vector<8x32xf32> to vector<1x8x32xf32>
    tpu.vector_store %arg5[%c0_52, %c0_53, %c0_54], %105 {strides = array<i32>} : memref<1x8x32xf32, #tpu.memory_space<vmem>>, vector<1x8x32xf32>,
    return
  }
  func.func @transform_0(%arg0: i32) -> (i32, i32, i32) {
    %c0_i32 = arith.constant 0 : i32
    %c0_i32_0 = arith.constant 0 : i32
    %c0_i32_1 = arith.constant 0 : i32
    return %arg0, %c0_i32, %c0_i32_0 : i32, i32, i32
  }
  func.func @transform_1(%arg0: i32) -> (i32, i32) {
    %c0_i32 = arith.constant 0 : i32
    %c0_i32_0 = arith.constant 0 : i32
    %c0_i32_1 = arith.constant 0 : i32
    return %c0_i32, %c0_i32_0 : i32, i32
  }
  func.func @transform_2(%arg0: i32) -> (i32, i32) {
    %c0_i32 = arith.constant 0 : i32
    %c0_i32_0 = arith.constant 0 : i32
    %c0_i32_1 = arith.constant 0 : i32
    return %c0_i32, %c0_i32_0 : i32, i32
  }
  func.func @transform_3(%arg0: i32) -> (i32, i32) {
    %c0_i32 = arith.constant 0 : i32
    %c0_i32_0 = arith.constant 0 : i32
    %c0_i32_1 = arith.constant 0 : i32
    return %c0_i32, %c0_i32_0 : i32, i32
  }
  func.func @transform_4(%arg0: i32) -> (i32, i32, i32) {
    %c0_i32 = arith.constant 0 : i32
    %c0_i32_0 = arith.constant 0 : i32
    %c0_i32_1 = arith.constant 0 : i32
    return %arg0, %c0_i32, %c0_i32_0 : i32, i32, i32
  }
}

</mosaic_0001>

<llo_original>
// kernel: attention_forward.1
$region0: #{attention_forward.1}
  #allocation0 [shape = 'u32[]', space=smem, size = 0x4, offset = 0x4, fixed_abs, tag = 'smem constant byte address 0x4 - core index']
  #allocation1 [shape = 'u32[144,128]{1,0:T(1,128)}', space=vmem, size = 0x12000, scoped, tag = 'internal scratch']
  #allocation2 [shape = 'bf16[8,96]{1,0:T(8,128)(2,1)}', space=vmem, size = 0x800, scoped, tag = 'scratch operand']
  %s0 = inlined_call_operand.hbm [shape: f32[2,8,32], index: 0, kind: input, shape index: {}]
  %s1 = inlined_call_operand.hbm [shape: f32[32,96], index: 1, kind: input, shape index: {}]
  %s2 = inlined_call_operand.hbm [shape: f32[32,32], index: 2, kind: input, shape index: {}]
  %s3 = inlined_call_operand.vmem [shape: f32[1,32], index: 3, kind: input, shape index: {}]
  %s4 = inlined_call_operand.hbm [shape: f32[2,8,32], index: 4, kind: output, shape index: {}]
  %s5 = sld [smem:[#allocation0]]
  $region61: #{attention_forward.1} parent=0
    _
  %s7 = ssub.s32 1, %s5
  %s8 = scalar_select 0, %s7, %s5
  $region1: #{attention_forward.1} parent=0
    #allocation3 [shape = 'u8[8192]{0}', space=vmem, size = 0x2000, scoped, tag = 'input window, operand 0']
    #allocation4 [shape = 's32[2]{0}', space=sflag, size = 0x8, scoped, tag = 'scoped memory for attention_forward.1']
    #allocation5 [shape = 's32[2]{0}', space=sflag, size = 0x8, scoped, tag = 'scoped memory for attention_forward.1']
    #allocation6 [shape = 'u8[16384]{0}', space=vmem, size = 0x4000, scoped, tag = 'input window, operand 1, single buffered']
    #allocation7 [shape = 's32[1]{0}', space=sflag, size = 0x4, scoped, tag = 'scoped memory for attention_forward.1']
    #allocation8 [shape = 'u8[16384]{0}', space=vmem, size = 0x4000, scoped, tag = 'input window, operand 2, single buffered']
    #allocation9 [shape = 'u8[8192]{0}', space=vmem, size = 0x2000, scoped, tag = 'output window, operand 0']
    %9 = vsyncpa [#allocation4], 0
    %s10 = scalar_lea.sflag [#allocation4], 1
    %11 = vsyncpa %s10, 0
    %12 = vsyncpa [#allocation7], 0
    %13 = vsyncpa [#allocation5], 0
    %s14 = scalar_lea.sflag [#allocation5], 1
    %15 = vsyncpa %s14, 0
    loop: start=0, step=1, limit=4
    $region2: #{attention_forward.1} parent=1 // loop_pre_header
      _
    $region3: #{attention_forward.1} parent=1 // loop_header
      %s17 = sphi 0, %s21
      %p18 = scmp.ge.s32.totalorder %s17, 4
      %s27 = sphi 0, %s29
      %s30 = sphi 0, %s27
      %s31 = sphi 0, %s30
      %s47 = sphi 0, %s31
      %s51 = sphi 0, %s51
      %s53 = sphi 0, %s51
      %s54 = sphi 0, %s53
      %s68 = sphi 0, %s54
      %s72 = sphi 0, %s72
      %s74 = sphi 0, %s72
      %s75 = sphi 0, %s74
      %s89 = sphi 0, %s75
      %s93 = sphi 0, %s93
      %s95 = sphi 0, %s93
      %s96 = sphi 0, %s95
      %s110 = sphi 0, %s96
      %s116 = sphi 0, %s118
      %s119 = sphi 0, %s116
      %s120 = sphi 0, %s119
      %s136 = sphi 0, %s120
    $region4: #{attention_forward.1} parent=1 // loop_header_branch
      %20 = sbr.rel (%p18) target = $region8
    $region5: #{attention_forward.1} parent=1 // loop_body
      %s22 = ssub.s32 %s17, 1
      %s23 = ssub.s32 %s17, 2
      %s24 = sadd.s32 %s17, 1
      %s25 = ssub.s32 %s17, %s24
      %p26 = scmp.eq.s32.totalorder %s25, 0
      %s28 = sadd.s32 %s27, 1
      %s29 = scalar_select %p26, %s27, %s28
      %p32 = pneg %p26
      %p33 = scmp.eq.s32.totalorder %s17, 1
      %p34 = por %p32, %p33
      %p35 = scmp.ne.s32.totalorder %s27, %s30
      %p36 = scmp.eq.s32.totalorder %s17, 0
      %p37 = por %p35, %p36
      %p38 = scmp.ne.s32.totalorder %s27, %s30
      %p39 = scmp.eq.s32.totalorder %s22, 1
      %p40 = por %p38, %p39
      %p41 = scmp.ne.s32.totalorder %s30, %s31
      %p42 = scmp.eq.s32.totalorder %s22, 0
      %p43 = por %p41, %p42
      %p44 = scmp.ne.s32.totalorder %s30, %s31
      %p45 = scmp.eq.s32.totalorder %s23, 1
      %p46 = por %p44, %p45
      %p48 = scmp.ne.s32.totalorder %s31, %s47
      %p49 = scmp.eq.s32.totalorder %s23, 0
      %p50 = por %p48, %p49
      %s52 = sadd.s32 %s51, 1
      %p55 = scmp.eq.s32.totalorder %s17, 1
      %p56 = scmp.ne.s32.totalorder %s51, %s53
      %p57 = scmp.eq.s32.totalorder %s17, 0
      %p58 = por %p56, %p57
      %p59 = scmp.ne.s32.totalorder %s51, %s53
      %p60 = scmp.eq.s32.totalorder %s22, 1
      %p61 = por %p59, %p60
      %p62 = scmp.ne.s32.totalorder %s53, %s54
      %p63 = scmp.eq.s32.totalorder %s22, 0
      %p64 = por %p62, %p63
      %p65 = scmp.ne.s32.totalorder %s53, %s54
      %p66 = scmp.eq.s32.totalorder %s23, 1
      %p67 = por %p65, %p66
      %p69 = scmp.ne.s32.totalorder %s54, %s68
      %p70 = scmp.eq.s32.totalorder %s23, 0
      %p71 = por %p69, %p70
      %s73 = sadd.s32 %s72, 1
      %p76 = scmp.eq.s32.totalorder %s17, 1
      %p77 = scmp.ne.s32.totalorder %s72, %s74
      %p78 = scmp.eq.s32.totalorder %s17, 0
      %p79 = por %p77, %p78
      %p80 = scmp.ne.s32.totalorder %s72, %s74
      %p81 = scmp.eq.s32.totalorder %s22, 1
      %p82 = por %p80, %p81
      %p83 = scmp.ne.s32.totalorder %s74, %s75
      %p84 = scmp.eq.s32.totalorder %s22, 0
      %p85 = por %p83, %p84
      %p86 = scmp.ne.s32.totalorder %s74, %s75
      %p87 = scmp.eq.s32.totalorder %s23, 1
      %p88 = por %p86, %p87
      %p90 = scmp.ne.s32.totalorder %s75, %s89
      %p91 = scmp.eq.s32.totalorder %s23, 0
      %p92 = por %p90, %p91
      %s94 = sadd.s32 %s93, 1
      %p97 = scmp.eq.s32.totalorder %s17, 1
      %p98 = scmp.ne.s32.totalorder %s93, %s95
      %p99 = scmp.eq.s32.totalorder %s17, 0
      %p100 = por %p98, %p99
      %p101 = scmp.ne.s32.totalorder %s93, %s95
      %p102 = scmp.eq.s32.totalorder %s22, 1
      %p103 = por %p101, %p102
      %p104 = scmp.ne.s32.totalorder %s95, %s96
      %p105 = scmp.eq.s32.totalorder %s22, 0
      %p106 = por %p104, %p105
      %p107 = scmp.ne.s32.totalorder %s95, %s96
      %p108 = scmp.eq.s32.totalorder %s23, 1
      %p109 = por %p107, %p108
      %p111 = scmp.ne.s32.totalorder %s96, %s110
      %p112 = scmp.eq.s32.totalorder %s23, 0
      %p113 = por %p111, %p112
      %s114 = ssub.s32 %s17, %s24
      %p115 = scmp.eq.s32.totalorder %s114, 0
      %s117 = sadd.s32 %s116, 1
      %s118 = scalar_select %p115, %s116, %s117
      %p121 = pneg %p115
      %p122 = scmp.eq.s32.totalorder %s17, 1
      %p123 = por %p121, %p122
      %p124 = scmp.ne.s32.totalorder %s116, %s119
      %p125 = scmp.eq.s32.totalorder %s17, 0
      %p126 = por %p124, %p125
      %p127 = scmp.ne.s32.totalorder %s116, %s119
      %p128 = scmp.eq.s32.totalorder %s22, 1
      %p129 = por %p127, %p128
      %p130 = scmp.ne.s32.totalorder %s119, %s120
      %p131 = scmp.eq.s32.totalorder %s22, 0
      %p132 = por %p130, %p131
      %p133 = scmp.ne.s32.totalorder %s119, %s120
      %p134 = scmp.eq.s32.totalorder %s23, 1
      %p135 = por %p133, %p134
      %p137 = scmp.ne.s32.totalorder %s120, %s136
      %p138 = scmp.eq.s32.totalorder %s23, 0
      %p139 = por %p137, %p138
      %p140 = scmp.le.s32.totalorder 1, %s17
      %p141 = scmp.lt.s32.totalorder %s17, 3
      %p142 = pnand %p140, %p141
      %p143 = pneg %p142
      // Predicated region
      $region9: #{attention_forward.1} parent=5 // pred_check
        _
      $region10: #{attention_forward.1} parent=5 // pred_check_branch
        %145 = sbr.rel (%p142) target = $region12
      $region11: #{attention_forward.1} parent=5 // pred_region
        %s146 = ssub.s32 %s17, 1
        // Predicated region
        $region13: #{attention_forward.1} parent=11 // pred_check
          %p147 = pneg %p64
        $region14: #{attention_forward.1} parent=11 // pred_check_branch
          %149 = sbr.rel (%p147) target = $region16
        $region15: #{attention_forward.1} parent=11 // pred_region
          %s151 = ssub.s32 512, 512
          %152 = vsyncadd [#allocation7], %s151
          %s153 = sshll.u32 [#allocation6], 4
          %s154 = int_to_ptr.vmem [resolvable:$true] %s153
          %159 = dma.hbm_to_vmem [thread:$0]  %s1, 512, %s154, [#allocation7], 128, 128, 8
        $region16: #{attention_forward.1} parent=11 // pred_fallthru
          _
        // Predicated region
        $region17: #{attention_forward.1} parent=11 // pred_check
          %p160 = pneg %p85
        $region18: #{attention_forward.1} parent=11 // pred_check_branch
          %162 = sbr.rel (%p160) target = $region20
        $region19: #{attention_forward.1} parent=11 // pred_region
          %s164 = ssub.s32 512, 512
          %165 = vsyncadd [#allocation7], %s164
          %s166 = sshll.u32 [#allocation8], 4
          %s167 = int_to_ptr.vmem [resolvable:$true] %s166
          %172 = dma.hbm_to_vmem [thread:$0]  %s2, 512, %s167, [#allocation7], 128, 128, 8
        $region20: #{attention_forward.1} parent=11 // pred_fallthru
          _
        // Predicated region
        $region21: #{attention_forward.1} parent=11 // pred_check
          %p173 = pneg %p106
        $region22: #{attention_forward.1} parent=11 // pred_check_branch
          %175 = sbr.rel (%p173) target = $region24
        $region23: #{attention_forward.1} parent=11 // pred_region
          _
        $region24: #{attention_forward.1} parent=11 // pred_fallthru
          _
      $region12: #{attention_forward.1} parent=5 // pred_fallthru
        _
      %p176 = scmp.lt.s32.totalorder %s17, 2
      // Predicated region
      $region25: #{attention_forward.1} parent=5 // pred_check
        %p177 = pneg %p176
      $region26: #{attention_forward.1} parent=5 // pred_check_branch
        %179 = sbr.rel (%p177) target = $region28
      $region27: #{attention_forward.1} parent=5 // pred_region
        // Predicated region
        $region29: #{attention_forward.1} parent=27 // pred_check
          %p180 = pneg %p37
        $region30: #{attention_forward.1} parent=27 // pred_check_branch
          %182 = sbr.rel (%p180) target = $region32
        $region31: #{attention_forward.1} parent=27 // pred_region
          %s183 = sand.u32 %s27, 1
          %s184 = scalar_lea.sflag [#allocation4], %s183
          %s185 = sand.u32 %s27, 1
          %s186 = smul.addr %s185, 8
          %s187 = scalar_lea.vmem [#allocation3], %s186
          %s189 = ssub.s32 128, 128
          %190 = vsyncadd %s184, %s189
          %s191 = smul.addr %s17, 128
          %s192 = scalar_lea.hbm %s0, %s191
          %s194 = sshll.u32 %s187, 4
          %s195 = int_to_ptr.vmem [resolvable:$true] %s194
          %197 = dma.hbm_to_vmem [thread:$0]  %s192, 128, %s195, %s184
        $region32: #{attention_forward.1} parent=27 // pred_fallthru
          _
      $region28: #{attention_forward.1} parent=5 // pred_fallthru
        _
      %p198 = scmp.le.s32.totalorder 1, %s17
      %p199 = scmp.lt.s32.totalorder %s17, 3
      %p200 = pnand %p198, %p199
      %p201 = pneg %p200
      // Predicated region
      $region33: #{attention_forward.1} parent=5 // pred_check
        _
      $region34: #{attention_forward.1} parent=5 // pred_check_branch
        %203 = sbr.rel (%p200) target = $region36
      $region35: #{attention_forward.1} parent=5 // pred_region
        %s204 = ssub.s32 %s17, 1
        %s205 = sand.u32 %s30, 1
        %s206 = scalar_lea.sflag [#allocation4], %s205
        %s207 = sand.u32 %s30, 1
        %s208 = smul.addr %s207, 8
        %s209 = scalar_lea.vmem [#allocation3], %s208
        // Predicated region
        $region37: #{attention_forward.1} parent=35 // pred_check
          %p210 = pneg %p43
        $region38: #{attention_forward.1} parent=35 // pred_check_branch
          %212 = sbr.rel (%p210) target = $region40
        $region39: #{attention_forward.1} parent=35 // pred_region
          %213 = dma.done %s206, 128
        $region40: #{attention_forward.1} parent=35 // pred_fallthru
          _
        // Predicated region
        $region41: #{attention_forward.1} parent=35 // pred_check
          %p214 = pneg %p64
        $region42: #{attention_forward.1} parent=35 // pred_check_branch
          %216 = sbr.rel (%p214) target = $region44
        $region43: #{attention_forward.1} parent=35 // pred_region
          %217 = dma.done [#allocation7], 512
        $region44: #{attention_forward.1} parent=35 // pred_fallthru
          _
        // Predicated region
        $region45: #{attention_forward.1} parent=35 // pred_check
          %p218 = pneg %p85
        $region46: #{attention_forward.1} parent=35 // pred_check_branch
          %220 = sbr.rel (%p218) target = $region48
        $region47: #{attention_forward.1} parent=35 // pred_region
          %221 = dma.done [#allocation7], 512
        $region48: #{attention_forward.1} parent=35 // pred_fallthru
          _
        %s222 = sand.u32 %s30, 1
        %s223 = scalar_lea.sflag [#allocation4], %s222
        %s224 = sand.u32 %s30, 1
        %s225 = smul.addr %s224, 8
        %s226 = scalar_lea.vmem [#allocation3], %s225
        %p227 = pneg %p43
        %p228 = pneg %p40
        %p229 = pneg %p64
        %p230 = pneg %p61
        %p231 = pneg %p85
        %p232 = pneg %p82
        %p233 = pneg %p106
        %p234 = pneg %p103
        %p235 = pneg %p132
        %p236 = pneg %p129
        %s237 = sand.u32 %s119, 1
        %s238 = scalar_lea.sflag [#allocation5], %s237
        %s239 = sand.u32 %s119, 1
        %s240 = smul.addr %s239, 8
        %s241 = scalar_lea.vmem [#allocation9], %s240
        %v243 = vld [vmem:[%s209] sm:$0xff]
        %v244 = vpack.c.bf16 %v243, %v243
        %v245 = vld [vmem:[#allocation6] sm:$0xff]
        %v246 = vld [vmem:[#allocation6 + $0x8] sm:$0xff]
        %v247 = vld [vmem:[#allocation6 + $0x10] sm:$0xff]
        %v248 = vld [vmem:[#allocation6 + $0x18] sm:$0xff]
        %v249 = vpack.c.bf16 %v246, %v245
        %v250 = vpack.c.bf16 %v248, %v247
        %vm251 = vcmask 261120
        %v253 = vsel %vm251, %v244, 0
        %255 = vmatprep.subr.bf16.mxu0 0
        %256 = vmatpush1.bf16.msra.mxu0 0
        %257 = vmatprep.subr.bf16.mxu0 0
        %258 = vmatpush1.bf16.msra.mxu0 0
        %259 = vmatprep.subr.bf16.mxu0 0
        %260 = vmatpush1.bf16.msra.mxu0 0
        %261 = vmatprep.subr.bf16.mxu0 0
        %262 = vmatpush1.bf16.msra.mxu0 0
        %263 = vmatprep.subr.bf16.mxu0 0
        %264 = vmatpush1.bf16.msra.mxu0 0
        %265 = vmatprep.subr.bf16.mxu0 0
        %266 = vmatpush1.bf16.msra.mxu0 0
        %267 = vmatprep.subr.bf16.mxu0 0
        %268 = vmatpush1.bf16.msra.mxu0 %v250
        %269 = vmatprep.subr.bf16.mxu0 0
        %270 = vmatpush1.bf16.msra.mxu0 %v249
        %271 = vmatprep.subr.bf16.mxu0 0
        %272 = vmatpush2.bf16.msra.mxu0 0
        %273 = vmatprep.subr.bf16.mxu0 0
        %274 = vmatpush2.bf16.msra.mxu0 0
        %275 = vmatprep.subr.bf16.mxu0 0
        %276 = vmatpush2.bf16.msra.mxu0 0
        %277 = vmatprep.subr.bf16.mxu0 0
        %278 = vmatpush2.bf16.msra.mxu0 0
        %279 = vmatprep.subr.bf16.mxu0 0
        %280 = vmatpush2.bf16.msra.mxu0 0
        %281 = vmatprep.subr.bf16.mxu0 0
        %282 = vmatpush2.bf16.msra.mxu0 0
        %283 = vmatprep.subr.bf16.mxu0 0
        %284 = vmatpush2.bf16.msra.mxu0 0
        %285 = vmatprep.subr.bf16.mxu0 0
        %286 = vmatpush2.bf16.msra.mxu0 0
        %287 = vmatprep.mubr.bf16.mxu0 0
        %288 = vmatmul.mubr.bf16.gmra.mxu0 %v253
        %v289 = vpop.f32.mrf.mxu0
        %v290 = vadd.f32 0.0, %v289
        %v291 = vpop.f32.mrf.mxu0
        %v292 = vpop.f32.mrf.mxu0
        %v293 = vpop.f32.mrf.mxu0
        %294 = vdwg.mxu0
        %v295 = vlaneseq
        %v296 = vand.u32 %v295, 127
        %vm297 = vcmp.lt.s32.totalorder %v296, 32
        %v298 = vsel %vm297, 0.35355338, 1.0
        %v299 = vmul.f32 %v290, %v298
        %v300 = vpack.c.bf16 %v299, %v299
        %vm301 = vcmask 781312
        %302 = vst.msk [vmem:[#allocation2] sm:$0xf] %vm301, %v300
        %v303 = vld [vmem:[#allocation2] sm:$0xf]
        %v305 = vunpack.c.l.b16 %v303
        %v306 = vpack.c.b16 %v305, %v305
        %307 = vrot.lane.b32.xlu0 %v306, 96
        %v308 = vpop.permute.xlu0 %307
        %vm309 = vcmask 64512
        %v311 = vsel %vm309, %v303, 0
        %v314 = vsel %vm309, %v308, 0
        %316 = vmatprep.subr.bf16.mxu0 0
        %317 = vmatpush1.bf16.xpose.msra.mxu0 0
        %318 = vmatprep.subr.bf16.mxu0 0
        %319 = vmatpush1.bf16.xpose.msra.mxu0 0
        %320 = vmatprep.subr.bf16.mxu0 0
        %321 = vmatpush1.bf16.xpose.msra.mxu0 0
        %322 = vmatprep.subr.bf16.mxu0 0
        %323 = vmatpush1.bf16.xpose.msra.mxu0 0
        %324 = vmatprep.subr.bf16.mxu0 0
        %325 = vmatpush1.bf16.xpose.msra.mxu0 0
        %326 = vmatprep.subr.bf16.mxu0 0
        %327 = vmatpush1.bf16.xpose.msra.mxu0 0
        %328 = vmatprep.subr.bf16.mxu0 0
        %329 = vmatpush1.bf16.xpose.msra.mxu0 0
        %330 = vmatprep.subr.bf16.mxu0 0
        %331 = vmatpush1.bf16.xpose.msra.mxu0 %v314
        %332 = vmatprep.subr.bf16.mxu0 0
        %333 = vmatpush2.bf16.xpose.msra.mxu0 0
        %334 = vmatprep.subr.bf16.mxu0 0
        %335 = vmatpush2.bf16.xpose.msra.mxu0 0
        %336 = vmatprep.subr.bf16.mxu0 0
        %337 = vmatpush2.bf16.xpose.msra.mxu0 0
        %338 = vmatprep.subr.bf16.mxu0 0
        %339 = vmatpush2.bf16.xpose.msra.mxu0 0
        %340 = vmatprep.subr.bf16.mxu0 0
        %341 = vmatpush2.bf16.xpose.msra.mxu0 0
        %342 = vmatprep.subr.bf16.mxu0 0
        %343 = vmatpush2.bf16.xpose.msra.mxu0 0
        %344 = vmatprep.subr.bf16.mxu0 0
        %345 = vmatpush2.bf16.xpose.msra.mxu0 0
        %346 = vmatprep.subr.bf16.mxu0 0
        %347 = vmatpush2.bf16.xpose.msra.mxu0 0
        %348 = vmatprep.mubr.bf16.mxu0 0
        %349 = vmatmul.mubr.bf16.gmra.mxu0 %v311
        %v350 = vpop.f32.mrf.mxu0
        %v351 = vadd.f32 0.0, %v350
        %v352 = vpop.f32.mrf.mxu0
        %v353 = vpop.f32.mrf.mxu0
        %v354 = vpop.f32.mrf.mxu0
        %355 = vdwg.mxu0
        %v356 = vsel %vm309, %v351, -inf
        %357 = vmax.xlane.f32.xlu0 %v356
        %v358 = vpop.xlane.xlu0 %357
        %v359 = vsub.f32 %v351, %v358
        %v360 = vmul.f32 %v359, 1.442695
        %v361 = vpow.pop %v360
        %v362 = vsel %vm309, %v361, 0.0
        %363 = vadd.xlane.f32.xlu0 %v362
        %v364 = vpop.xlane.xlu0 %363
        %v365 = vrcp.pop %v364
        %v366 = vmul.f32 %v361, %v365
        %v367 = vpack.c.bf16 %v366, %v366
        %368 = vrot.lane.b32.xlu0 %v306, 64
        %v369 = vpop.permute.xlu0 %368
        %v371 = vsel %vm309, %v367, 0
        %vm373 = vcmask 1043456
        %v375 = vsel %vm373, %v369, 0
        %377 = vmatprep.subr.bf16.mxu0 0
        %378 = vmatpush1.bf16.msra.mxu0 0
        %379 = vmatprep.subr.bf16.mxu0 0
        %380 = vmatpush1.bf16.msra.mxu0 0
        %381 = vmatprep.subr.bf16.mxu0 0
        %382 = vmatpush1.bf16.msra.mxu0 0
        %383 = vmatprep.subr.bf16.mxu0 0
        %384 = vmatpush1.bf16.msra.mxu0 0
        %385 = vmatprep.subr.bf16.mxu0 0
        %386 = vmatpush1.bf16.msra.mxu0 0
        %387 = vmatprep.subr.bf16.mxu0 0
        %388 = vmatpush1.bf16.msra.mxu0 0
        %389 = vmatprep.subr.bf16.mxu0 0
        %390 = vmatpush1.bf16.msra.mxu0 0
        %391 = vmatprep.subr.bf16.mxu0 0
        %392 = vmatpush1.bf16.msra.mxu0 %v375
        %393 = vmatprep.subr.bf16.mxu0 0
        %394 = vmatpush2.bf16.msra.mxu0 0
        %395 = vmatprep.subr.bf16.mxu0 0
        %396 = vmatpush2.bf16.msra.mxu0 0
        %397 = vmatprep.subr.bf16.mxu0 0
        %398 = vmatpush2.bf16.msra.mxu0 0
        %399 = vmatprep.subr.bf16.mxu0 0
        %400 = vmatpush2.bf16.msra.mxu0 0
        %401 = vmatprep.subr.bf16.mxu0 0
        %402 = vmatpush2.bf16.msra.mxu0 0
        %403 = vmatprep.subr.bf16.mxu0 0
        %404 = vmatpush2.bf16.msra.mxu0 0
        %405 = vmatprep.subr.bf16.mxu0 0
        %406 = vmatpush2.bf16.msra.mxu0 0
        %407 = vmatprep.subr.bf16.mxu0 0
        %408 = vmatpush2.bf16.msra.mxu0 0
        %409 = vmatprep.mubr.bf16.mxu0 0
        %410 = vmatmul.mubr.bf16.gmra.mxu0 %v371
        %v411 = vpop.f32.mrf.mxu0
        %v412 = vadd.f32 0.0, %v411
        %v413 = vpop.f32.mrf.mxu0
        %v414 = vpop.f32.mrf.mxu0
        %v415 = vpop.f32.mrf.mxu0
        %416 = vdwg.mxu0
        %v417 = vld [vmem:[#allocation8] sm:$0xff]
        %v418 = vpack.c.bf16 %v417, %v417
        %v419 = vpack.c.bf16 %v412, %v412
        %420 = vrot.lane.b32.xlu0 %v306, 120
        %v421 = vpop.permute.xlu0 %420
        %422 = vrot.lane.b32.xlu0 %v306, 88
        %v423 = vpop.permute.xlu0 %422
        %v425 = vsel %vm309, %v421, 0
        %v428 = vsel %vm309, %v423, 0
        %430 = vmatprep.subr.bf16.mxu0 0
        %431 = vmatpush1.bf16.xpose.msra.mxu0 0
        %432 = vmatprep.subr.bf16.mxu0 0
        %433 = vmatpush1.bf16.xpose.msra.mxu0 0
        %434 = vmatprep.subr.bf16.mxu0 0
        %435 = vmatpush1.bf16.xpose.msra.mxu0 0
        %436 = vmatprep.subr.bf16.mxu0 0
        %437 = vmatpush1.bf16.xpose.msra.mxu0 0
        %438 = vmatprep.subr.bf16.mxu0 0
        %439 = vmatpush1.bf16.xpose.msra.mxu0 0
        %440 = vmatprep.subr.bf16.mxu0 0
        %441 = vmatpush1.bf16.xpose.msra.mxu0 0
        %442 = vmatprep.subr.bf16.mxu0 0
        %443 = vmatpush1.bf16.xpose.msra.mxu0 0
        %444 = vmatprep.subr.bf16.mxu0 0
        %445 = vmatpush1.bf16.xpose.msra.mxu0 %v428
        %446 = vmatprep.subr.bf16.mxu0 0
        %447 = vmatpush2.bf16.xpose.msra.mxu0 0
        %448 = vmatprep.subr.bf16.mxu0 0
        %449 = vmatpush2.bf16.xpose.msra.mxu0 0
        %450 = vmatprep.subr.bf16.mxu0 0
        %451 = vmatpush2.bf16.xpose.msra.mxu0 0
        %452 = vmatprep.subr.bf16.mxu0 0
        %453 = vmatpush2.bf16.xpose.msra.mxu0 0
        %454 = vmatprep.subr.bf16.mxu0 0
        %455 = vmatpush2.bf16.xpose.msra.mxu0 0
        %456 = vmatprep.subr.bf16.mxu0 0
        %457 = vmatpush2.bf16.xpose.msra.mxu0 0
        %458 = vmatprep.subr.bf16.mxu0 0
        %459 = vmatpush2.bf16.xpose.msra.mxu0 0
        %460 = vmatprep.subr.bf16.mxu0 0
        %461 = vmatpush2.bf16.xpose.msra.mxu0 0
        %462 = vmatprep.mubr.bf16.mxu0 0
        %463 = vmatmul.mubr.bf16.gmra.mxu0 %v425
        %v464 = vpop.f32.mrf.mxu0
        %v465 = vadd.f32 0.0, %v464
        %v466 = vpop.f32.mrf.mxu0
        %v467 = vpop.f32.mrf.mxu0
        %v468 = vpop.f32.mrf.mxu0
        %469 = vdwg.mxu0
        %v470 = vsel %vm309, %v465, -inf
        %471 = vmax.xlane.f32.xlu0 %v470
        %v472 = vpop.xlane.xlu0 %471
        %v473 = vsub.f32 %v465, %v472
        %v474 = vmul.f32 %v473, 1.442695
        %v475 = vpow.pop %v474
        %v476 = vsel %vm309, %v475, 0.0
        %477 = vadd.xlane.f32.xlu0 %v476
        %v478 = vpop.xlane.xlu0 %477
        %v479 = vrcp.pop %v478
        %v480 = vmul.f32 %v475, %v479
        %v481 = vpack.c.bf16 %v480, %v480
        %482 = vrot.lane.b32.xlu0 %v306, 56
        %v483 = vpop.permute.xlu0 %482
        %v485 = vsel %vm309, %v481, 0
        %v488 = vsel %vm373, %v483, 0
        %490 = vmatprep.subr.bf16.mxu0 0
        %491 = vmatpush1.bf16.msra.mxu0 0
        %492 = vmatprep.subr.bf16.mxu0 0
        %493 = vmatpush1.bf16.msra.mxu0 0
        %494 = vmatprep.subr.bf16.mxu0 0
        %495 = vmatpush1.bf16.msra.mxu0 0
        %496 = vmatprep.subr.bf16.mxu0 0
        %497 = vmatpush1.bf16.msra.mxu0 0
        %498 = vmatprep.subr.bf16.mxu0 0
        %499 = vmatpush1.bf16.msra.mxu0 0
        %500 = vmatprep.subr.bf16.mxu0 0
        %501 = vmatpush1.bf16.msra.mxu0 0
        %502 = vmatprep.subr.bf16.mxu0 0
        %503 = vmatpush1.bf16.msra.mxu0 0
        %504 = vmatprep.subr.bf16.mxu0 0
        %505 = vmatpush1.bf16.msra.mxu0 %v488
        %506 = vmatprep.subr.bf16.mxu0 0
        %507 = vmatpush2.bf16.msra.mxu0 0
        %508 = vmatprep.subr.bf16.mxu0 0
        %509 = vmatpush2.bf16.msra.mxu0 0
        %510 = vmatprep.subr.bf16.mxu0 0
        %511 = vmatpush2.bf16.msra.mxu0 0
        %512 = vmatprep.subr.bf16.mxu0 0
        %513 = vmatpush2.bf16.msra.mxu0 0
        %514 = vmatprep.subr.bf16.mxu0 0
        %515 = vmatpush2.bf16.msra.mxu0 0
        %516 = vmatprep.subr.bf16.mxu0 0
        %517 = vmatpush2.bf16.msra.mxu0 0
        %518 = vmatprep.subr.bf16.mxu0 0
        %519 = vmatpush2.bf16.msra.mxu0 0
        %520 = vmatprep.subr.bf16.mxu0 0
        %521 = vmatpush2.bf16.msra.mxu0 0
        %522 = vmatprep.mubr.bf16.mxu0 0
        %523 = vmatmul.mubr.bf16.gmra.mxu0 %v485
        %v524 = vpop.f32.mrf.mxu0
        %v525 = vadd.f32 0.0, %v524
        %v526 = vpop.f32.mrf.mxu0
        %v527 = vpop.f32.mrf.mxu0
        %v528 = vpop.f32.mrf.mxu0
        %529 = vdwg.mxu0
        %v530 = vld [vmem:[#allocation8 + $0x8] sm:$0xff]
        %v531 = vpack.c.bf16 %v530, %v530
        %v532 = vpack.c.bf16 %v525, %v525
        %v534 = vsel %vm309, %v532, 0
        %v537 = vsel %vm373, %v531, 0
        %539 = vmatprep.subr.bf16.mxu0 0
        %540 = vmatpush1.bf16.msra.mxu0 0
        %541 = vmatprep.subr.bf16.mxu0 0
        %542 = vmatpush1.bf16.msra.mxu0 0
        %543 = vmatprep.subr.bf16.mxu0 0
        %544 = vmatpush1.bf16.msra.mxu0 0
        %545 = vmatprep.subr.bf16.mxu0 0
        %546 = vmatpush1.bf16.msra.mxu0 0
        %547 = vmatprep.subr.bf16.mxu0 0
        %548 = vmatpush1.bf16.msra.mxu0 0
        %549 = vmatprep.subr.bf16.mxu0 0
        %550 = vmatpush1.bf16.msra.mxu0 0
        %551 = vmatprep.subr.bf16.mxu0 0
        %552 = vmatpush1.bf16.msra.mxu0 0
        %553 = vmatprep.subr.bf16.mxu0 0
        %554 = vmatpush1.bf16.msra.mxu0 %v537
        %555 = vmatprep.subr.bf16.mxu0 0
        %556 = vmatpush2.bf16.msra.mxu0 0
        %557 = vmatprep.subr.bf16.mxu0 0
        %558 = vmatpush2.bf16.msra.mxu0 0
        %559 = vmatprep.subr.bf16.mxu0 0
        %560 = vmatpush2.bf16.msra.mxu0 0
        %561 = vmatprep.subr.bf16.mxu0 0
        %562 = vmatpush2.bf16.msra.mxu0 0
        %563 = vmatprep.subr.bf16.mxu0 0
        %564 = vmatpush2.bf16.msra.mxu0 0
        %565 = vmatprep.subr.bf16.mxu0 0
        %566 = vmatpush2.bf16.msra.mxu0 0
        %567 = vmatprep.subr.bf16.mxu0 0
        %568 = vmatpush2.bf16.msra.mxu0 0
        %569 = vmatprep.subr.bf16.mxu0 0
        %570 = vmatpush2.bf16.msra.mxu0 0
        %571 = vmatprep.mubr.bf16.mxu0 0
        %572 = vmatmul.mubr.bf16.gmra.mxu0 %v534
        %v573 = vpop.f32.mrf.mxu0
        %v574 = vadd.f32 0.0, %v573
        %v575 = vpop.f32.mrf.mxu0
        %v576 = vpop.f32.mrf.mxu0
        %v577 = vpop.f32.mrf.mxu0
        %578 = vdwg.mxu0
        %v580 = vsel %vm309, %v419, 0
        %v583 = vsel %vm373, %v418, 0
        %585 = vmatprep.subr.bf16.mxu0 0
        %586 = vmatpush1.bf16.msra.mxu0 0
        %587 = vmatprep.subr.bf16.mxu0 0
        %588 = vmatpush1.bf16.msra.mxu0 0
        %589 = vmatprep.subr.bf16.mxu0 0
        %590 = vmatpush1.bf16.msra.mxu0 0
        %591 = vmatprep.subr.bf16.mxu0 0
        %592 = vmatpush1.bf16.msra.mxu0 0
        %593 = vmatprep.subr.bf16.mxu0 0
        %594 = vmatpush1.bf16.msra.mxu0 0
        %595 = vmatprep.subr.bf16.mxu0 0
        %596 = vmatpush1.bf16.msra.mxu0 0
        %597 = vmatprep.subr.bf16.mxu0 0
        %598 = vmatpush1.bf16.msra.mxu0 0
        %599 = vmatprep.subr.bf16.mxu0 0
        %600 = vmatpush1.bf16.msra.mxu0 %v583
        %601 = vmatprep.subr.bf16.mxu0 0
        %602 = vmatpush2.bf16.msra.mxu0 0
        %603 = vmatprep.subr.bf16.mxu0 0
        %604 = vmatpush2.bf16.msra.mxu0 0
        %605 = vmatprep.subr.bf16.mxu0 0
        %606 = vmatpush2.bf16.msra.mxu0 0
        %607 = vmatprep.subr.bf16.mxu0 0
        %608 = vmatpush2.bf16.msra.mxu0 0
        %609 = vmatprep.subr.bf16.mxu0 0
        %610 = vmatpush2.bf16.msra.mxu0 0
        %611 = vmatprep.subr.bf16.mxu0 0
        %612 = vmatpush2.bf16.msra.mxu0 0
        %613 = vmatprep.subr.bf16.mxu0 0
        %614 = vmatpush2.bf16.msra.mxu0 0
        %615 = vmatprep.subr.bf16.mxu0 0
        %616 = vmatpush2.bf16.msra.mxu0 0
        %617 = vmatprep.mubr.bf16.mxu0 0
        %618 = vmatmul.mubr.bf16.gmra.mxu0 %v580
        %v619 = vpop.f32.mrf.mxu0
        %v620 = vadd.f32 %v574, %v619
        %v621 = vpop.f32.mrf.mxu0
        %v622 = vpop.f32.mrf.mxu0
        %v623 = vpop.f32.mrf.mxu0
        %624 = vdwg.mxu0
        %625 = vrot.lane.b32.xlu0 %v306, 112
        %v626 = vpop.permute.xlu0 %625
        %627 = vrot.lane.b32.xlu0 %v306, 80
        %v628 = vpop.permute.xlu0 %627
        %v630 = vsel %vm309, %v626, 0
        %v633 = vsel %vm309, %v628, 0
        %635 = vmatprep.subr.bf16.mxu0 0
        %636 = vmatpush1.bf16.xpose.msra.mxu0 0
        %637 = vmatprep.subr.bf16.mxu0 0
        %638 = vmatpush1.bf16.xpose.msra.mxu0 0
        %639 = vmatprep.subr.bf16.mxu0 0
        %640 = vmatpush1.bf16.xpose.msra.mxu0 0
        %641 = vmatprep.subr.bf16.mxu0 0
        %642 = vmatpush1.bf16.xpose.msra.mxu0 0
        %643 = vmatprep.subr.bf16.mxu0 0
        %644 = vmatpush1.bf16.xpose.msra.mxu0 0
        %645 = vmatprep.subr.bf16.mxu0 0
        %646 = vmatpush1.bf16.xpose.msra.mxu0 0
        %647 = vmatprep.subr.bf16.mxu0 0
        %648 = vmatpush1.bf16.xpose.msra.mxu0 0
        %649 = vmatprep.subr.bf16.mxu0 0
        %650 = vmatpush1.bf16.xpose.msra.mxu0 %v633
        %651 = vmatprep.subr.bf16.mxu0 0
        %652 = vmatpush2.bf16.xpose.msra.mxu0 0
        %653 = vmatprep.subr.bf16.mxu0 0
        %654 = vmatpush2.bf16.xpose.msra.mxu0 0
        %655 = vmatprep.subr.bf16.mxu0 0
        %656 = vmatpush2.bf16.xpose.msra.mxu0 0
        %657 = vmatprep.subr.bf16.mxu0 0
        %658 = vmatpush2.bf16.xpose.msra.mxu0 0
        %659 = vmatprep.subr.bf16.mxu0 0
        %660 = vmatpush2.bf16.xpose.msra.mxu0 0
        %661 = vmatprep.subr.bf16.mxu0 0
        %662 = vmatpush2.bf16.xpose.msra.mxu0 0
        %663 = vmatprep.subr.bf16.mxu0 0
        %664 = vmatpush2.bf16.xpose.msra.mxu0 0
        %665 = vmatprep.subr.bf16.mxu0 0
        %666 = vmatpush2.bf16.xpose.msra.mxu0 0
        %667 = vmatprep.mubr.bf16.mxu0 0
        %668 = vmatmul.mubr.bf16.gmra.mxu0 %v630
        %v669 = vpop.f32.mrf.mxu0
        %v670 = vadd.f32 0.0, %v669
        %v671 = vpop.f32.mrf.mxu0
        %v672 = vpop.f32.mrf.mxu0
        %v673 = vpop.f32.mrf.mxu0
        %674 = vdwg.mxu0
        %v675 = vsel %vm309, %v670, -inf
        %676 = vmax.xlane.f32.xlu0 %v675
        %v677 = vpop.xlane.xlu0 %676
        %v678 = vsub.f32 %v670, %v677
        %v679 = vmul.f32 %v678, 1.442695
        %v680 = vpow.pop %v679
        %v681 = vsel %vm309, %v680, 0.0
        %682 = vadd.xlane.f32.xlu0 %v681
        %v683 = vpop.xlane.xlu0 %682
        %v684 = vrcp.pop %v683
        %v685 = vmul.f32 %v680, %v684
        %v686 = vpack.c.bf16 %v685, %v685
        %687 = vrot.lane.b32.xlu0 %v306, 48
        %v688 = vpop.permute.xlu0 %687
        %v690 = vsel %vm309, %v686, 0
        %v693 = vsel %vm373, %v688, 0
        %695 = vmatprep.subr.bf16.mxu0 0
        %696 = vmatpush1.bf16.msra.mxu0 0
        %697 = vmatprep.subr.bf16.mxu0 0
        %698 = vmatpush1.bf16.msra.mxu0 0
        %699 = vmatprep.subr.bf16.mxu0 0
        %700 = vmatpush1.bf16.msra.mxu0 0
        %701 = vmatprep.subr.bf16.mxu0 0
        %702 = vmatpush1.bf16.msra.mxu0 0
        %703 = vmatprep.subr.bf16.mxu0 0
        %704 = vmatpush1.bf16.msra.mxu0 0
        %705 = vmatprep.subr.bf16.mxu0 0
        %706 = vmatpush1.bf16.msra.mxu0 0
        %707 = vmatprep.subr.bf16.mxu0 0
        %708 = vmatpush1.bf16.msra.mxu0 0
        %709 = vmatprep.subr.bf16.mxu0 0
        %710 = vmatpush1.bf16.msra.mxu0 %v693
        %711 = vmatprep.subr.bf16.mxu0 0
        %712 = vmatpush2.bf16.msra.mxu0 0
        %713 = vmatprep.subr.bf16.mxu0 0
        %714 = vmatpush2.bf16.msra.mxu0 0
        %715 = vmatprep.subr.bf16.mxu0 0
        %716 = vmatpush2.bf16.msra.mxu0 0
        %717 = vmatprep.subr.bf16.mxu0 0
        %718 = vmatpush2.bf16.msra.mxu0 0
        %719 = vmatprep.subr.bf16.mxu0 0
        %720 = vmatpush2.bf16.msra.mxu0 0
        %721 = vmatprep.subr.bf16.mxu0 0
        %722 = vmatpush2.bf16.msra.mxu0 0
        %723 = vmatprep.subr.bf16.mxu0 0
        %724 = vmatpush2.bf16.msra.mxu0 0
        %725 = vmatprep.subr.bf16.mxu0 0
        %726 = vmatpush2.bf16.msra.mxu0 0
        %727 = vmatprep.mubr.bf16.mxu0 0
        %728 = vmatmul.mubr.bf16.gmra.mxu0 %v690
        %v729 = vpop.f32.mrf.mxu0
        %v730 = vadd.f32 0.0, %v729
        %v731 = vpop.f32.mrf.mxu0
        %v732 = vpop.f32.mrf.mxu0
        %v733 = vpop.f32.mrf.mxu0
        %734 = vdwg.mxu0
        %v735 = vld [vmem:[#allocation8 + $0x10] sm:$0xff]
        %v736 = vpack.c.bf16 %v735, %v735
        %v737 = vpack.c.bf16 %v730, %v730
        %v739 = vsel %vm309, %v737, 0
        %v742 = vsel %vm373, %v736, 0
        %744 = vmatprep.subr.bf16.mxu0 0
        %745 = vmatpush1.bf16.msra.mxu0 0
        %746 = vmatprep.subr.bf16.mxu0 0
        %747 = vmatpush1.bf16.msra.mxu0 0
        %748 = vmatprep.subr.bf16.mxu0 0
        %749 = vmatpush1.bf16.msra.mxu0 0
        %750 = vmatprep.subr.bf16.mxu0 0
        %751 = vmatpush1.bf16.msra.mxu0 0
        %752 = vmatprep.subr.bf16.mxu0 0
        %753 = vmatpush1.bf16.msra.mxu0 0
        %754 = vmatprep.subr.bf16.mxu0 0
        %755 = vmatpush1.bf16.msra.mxu0 0
        %756 = vmatprep.subr.bf16.mxu0 0
        %757 = vmatpush1.bf16.msra.mxu0 0
        %758 = vmatprep.subr.bf16.mxu0 0
        %759 = vmatpush1.bf16.msra.mxu0 %v742
        %760 = vmatprep.subr.bf16.mxu0 0
        %761 = vmatpush2.bf16.msra.mxu0 0
        %762 = vmatprep.subr.bf16.mxu0 0
        %763 = vmatpush2.bf16.msra.mxu0 0
        %764 = vmatprep.subr.bf16.mxu0 0
        %765 = vmatpush2.bf16.msra.mxu0 0
        %766 = vmatprep.subr.bf16.mxu0 0
        %767 = vmatpush2.bf16.msra.mxu0 0
        %768 = vmatprep.subr.bf16.mxu0 0
        %769 = vmatpush2.bf16.msra.mxu0 0
        %770 = vmatprep.subr.bf16.mxu0 0
        %771 = vmatpush2.bf16.msra.mxu0 0
        %772 = vmatprep.subr.bf16.mxu0 0
        %773 = vmatpush2.bf16.msra.mxu0 0
        %774 = vmatprep.subr.bf16.mxu0 0
        %775 = vmatpush2.bf16.msra.mxu0 0
        %776 = vmatprep.mubr.bf16.mxu0 0
        %777 = vmatmul.mubr.bf16.gmra.mxu0 %v739
        %v778 = vpop.f32.mrf.mxu0
        %v779 = vadd.f32 0.0, %v778
        %v780 = vpop.f32.mrf.mxu0
        %v781 = vpop.f32.mrf.mxu0
        %v782 = vpop.f32.mrf.mxu0
        %783 = vdwg.mxu0
        %v784 = vadd.f32 %v620, %v779
        %785 = vrot.lane.b32.xlu0 %v306, 104
        %v786 = vpop.permute.xlu0 %785
        %787 = vrot.lane.b32.xlu0 %v306, 72
        %v788 = vpop.permute.xlu0 %787
        %v790 = vsel %vm309, %v786, 0
        %v793 = vsel %vm309, %v788, 0
        %795 = vmatprep.subr.bf16.mxu0 0
        %796 = vmatpush1.bf16.xpose.msra.mxu0 0
        %797 = vmatprep.subr.bf16.mxu0 0
        %798 = vmatpush1.bf16.xpose.msra.mxu0 0
        %799 = vmatprep.subr.bf16.mxu0 0
        %800 = vmatpush1.bf16.xpose.msra.mxu0 0
        %801 = vmatprep.subr.bf16.mxu0 0
        %802 = vmatpush1.bf16.xpose.msra.mxu0 0
        %803 = vmatprep.subr.bf16.mxu0 0
        %804 = vmatpush1.bf16.xpose.msra.mxu0 0
        %805 = vmatprep.subr.bf16.mxu0 0
        %806 = vmatpush1.bf16.xpose.msra.mxu0 0
        %807 = vmatprep.subr.bf16.mxu0 0
        %808 = vmatpush1.bf16.xpose.msra.mxu0 0
        %809 = vmatprep.subr.bf16.mxu0 0
        %810 = vmatpush1.bf16.xpose.msra.mxu0 %v793
        %811 = vmatprep.subr.bf16.mxu0 0
        %812 = vmatpush2.bf16.xpose.msra.mxu0 0
        %813 = vmatprep.subr.bf16.mxu0 0
        %814 = vmatpush2.bf16.xpose.msra.mxu0 0
        %815 = vmatprep.subr.bf16.mxu0 0
        %816 = vmatpush2.bf16.xpose.msra.mxu0 0
        %817 = vmatprep.subr.bf16.mxu0 0
        %818 = vmatpush2.bf16.xpose.msra.mxu0 0
        %819 = vmatprep.subr.bf16.mxu0 0
        %820 = vmatpush2.bf16.xpose.msra.mxu0 0
        %821 = vmatprep.subr.bf16.mxu0 0
        %822 = vmatpush2.bf16.xpose.msra.mxu0 0
        %823 = vmatprep.subr.bf16.mxu0 0
        %824 = vmatpush2.bf16.xpose.msra.mxu0 0
        %825 = vmatprep.subr.bf16.mxu0 0
        %826 = vmatpush2.bf16.xpose.msra.mxu0 0
        %827 = vmatprep.mubr.bf16.mxu0 0
        %828 = vmatmul.mubr.bf16.gmra.mxu0 %v790
        %v829 = vpop.f32.mrf.mxu0
        %v830 = vadd.f32 0.0, %v829
        %v831 = vpop.f32.mrf.mxu0
        %v832 = vpop.f32.mrf.mxu0
        %v833 = vpop.f32.mrf.mxu0
        %834 = vdwg.mxu0
        %v835 = vsel %vm309, %v830, -inf
        %836 = vmax.xlane.f32.xlu0 %v835
        %v837 = vpop.xlane.xlu0 %836
        %v838 = vsub.f32 %v830, %v837
        %v839 = vmul.f32 %v838, 1.442695
        %v840 = vpow.pop %v839
        %v841 = vsel %vm309, %v840, 0.0
        %842 = vadd.xlane.f32.xlu0 %v841
        %v843 = vpop.xlane.xlu0 %842
        %v844 = vrcp.pop %v843
        %v845 = vmul.f32 %v840, %v844
        %v846 = vpack.c.bf16 %v845, %v845
        %847 = vrot.lane.b32.xlu0 %v306, 40
        %v848 = vpop.permute.xlu0 %847
        %v850 = vsel %vm309, %v846, 0
        %v853 = vsel %vm373, %v848, 0
        %855 = vmatprep.subr.bf16.mxu0 0
        %856 = vmatpush1.bf16.msra.mxu0 0
        %857 = vmatprep.subr.bf16.mxu0 0
        %858 = vmatpush1.bf16.msra.mxu0 0
        %859 = vmatprep.subr.bf16.mxu0 0
        %860 = vmatpush1.bf16.msra.mxu0 0
        %861 = vmatprep.subr.bf16.mxu0 0
        %862 = vmatpush1.bf16.msra.mxu0 0
        %863 = vmatprep.subr.bf16.mxu0 0
        %864 = vmatpush1.bf16.msra.mxu0 0
        %865 = vmatprep.subr.bf16.mxu0 0
        %866 = vmatpush1.bf16.msra.mxu0 0
        %867 = vmatprep.subr.bf16.mxu0 0
        %868 = vmatpush1.bf16.msra.mxu0 0
        %869 = vmatprep.subr.bf16.mxu0 0
        %870 = vmatpush1.bf16.msra.mxu0 %v853
        %871 = vmatprep.subr.bf16.mxu0 0
        %872 = vmatpush2.bf16.msra.mxu0 0
        %873 = vmatprep.subr.bf16.mxu0 0
        %874 = vmatpush2.bf16.msra.mxu0 0
        %875 = vmatprep.subr.bf16.mxu0 0
        %876 = vmatpush2.bf16.msra.mxu0 0
        %877 = vmatprep.subr.bf16.mxu0 0
        %878 = vmatpush2.bf16.msra.mxu0 0
        %879 = vmatprep.subr.bf16.mxu0 0
        %880 = vmatpush2.bf16.msra.mxu0 0
        %881 = vmatprep.subr.bf16.mxu0 0
        %882 = vmatpush2.bf16.msra.mxu0 0
        %883 = vmatprep.subr.bf16.mxu0 0
        %884 = vmatpush2.bf16.msra.mxu0 0
        %885 = vmatprep.subr.bf16.mxu0 0
        %886 = vmatpush2.bf16.msra.mxu0 0
        %887 = vmatprep.mubr.bf16.mxu0 0
        %888 = vmatmul.mubr.bf16.gmra.mxu0 %v850
        %v889 = vpop.f32.mrf.mxu0
        %v890 = vadd.f32 0.0, %v889
        %v891 = vpop.f32.mrf.mxu0
        %v892 = vpop.f32.mrf.mxu0
        %v893 = vpop.f32.mrf.mxu0
        %894 = vdwg.mxu0
        %v895 = vld [vmem:[#allocation8 + $0x18] sm:$0xff]
        %v896 = vpack.c.bf16 %v895, %v895
        %v897 = vpack.c.bf16 %v890, %v890
        %v899 = vsel %vm309, %v897, 0
        %v902 = vsel %vm373, %v896, 0
        %904 = vmatprep.subr.bf16.mxu0 0
        %905 = vmatpush1.bf16.msra.mxu0 0
        %906 = vmatprep.subr.bf16.mxu0 0
        %907 = vmatpush1.bf16.msra.mxu0 0
        %908 = vmatprep.subr.bf16.mxu0 0
        %909 = vmatpush1.bf16.msra.mxu0 0
        %910 = vmatprep.subr.bf16.mxu0 0
        %911 = vmatpush1.bf16.msra.mxu0 0
        %912 = vmatprep.subr.bf16.mxu0 0
        %913 = vmatpush1.bf16.msra.mxu0 0
        %914 = vmatprep.subr.bf16.mxu0 0
        %915 = vmatpush1.bf16.msra.mxu0 0
        %916 = vmatprep.subr.bf16.mxu0 0
        %917 = vmatpush1.bf16.msra.mxu0 0
        %918 = vmatprep.subr.bf16.mxu0 0
        %919 = vmatpush1.bf16.msra.mxu0 %v902
        %920 = vmatprep.subr.bf16.mxu0 0
        %921 = vmatpush2.bf16.msra.mxu0 0
        %922 = vmatprep.subr.bf16.mxu0 0
        %923 = vmatpush2.bf16.msra.mxu0 0
        %924 = vmatprep.subr.bf16.mxu0 0
        %925 = vmatpush2.bf16.msra.mxu0 0
        %926 = vmatprep.subr.bf16.mxu0 0
        %927 = vmatpush2.bf16.msra.mxu0 0
        %928 = vmatprep.subr.bf16.mxu0 0
        %929 = vmatpush2.bf16.msra.mxu0 0
        %930 = vmatprep.subr.bf16.mxu0 0
        %931 = vmatpush2.bf16.msra.mxu0 0
        %932 = vmatprep.subr.bf16.mxu0 0
        %933 = vmatpush2.bf16.msra.mxu0 0
        %934 = vmatprep.subr.bf16.mxu0 0
        %935 = vmatpush2.bf16.msra.mxu0 0
        %936 = vmatprep.mubr.bf16.mxu0 0
        %937 = vmatmul.mubr.bf16.gmra.mxu0 %v899
        %v938 = vpop.f32.mrf.mxu0
        %v939 = vadd.f32 0.0, %v938
        %v940 = vpop.f32.mrf.mxu0
        %v941 = vpop.f32.mrf.mxu0
        %v942 = vpop.f32.mrf.mxu0
        %943 = vdwg.mxu0
        %v944 = vadd.f32 %v784, %v939
        %v945 = vld [vmem:[%s3] sm:$0x1]
        %v947 = vlaneseq
        %v948 = vshrl.u32 %v947, 7
        %v949 = vsub.s32 0, %v948
        %v950 = vrot.slane %v945, %v949
        %v952 = vadd.f32 %v944, %v950
        %953 = vst.msk [vmem:[%s241] sm:$0xff] %vm251, %v952
        %s954 = sand.u32 %s119, 1
        %s955 = scalar_lea.sflag [#allocation5], %s954
        %s956 = sand.u32 %s119, 1
        %s957 = smul.addr %s956, 8
        %s958 = scalar_lea.vmem [#allocation9], %s957
        // Predicated region
        $region49: #{attention_forward.1} parent=35 // pred_check
          %p959 = pneg %p129
        $region50: #{attention_forward.1} parent=35 // pred_check_branch
          %961 = sbr.rel (%p959) target = $region52
        $region51: #{attention_forward.1} parent=35 // pred_region
          %s963 = ssub.s32 128, 128
          %964 = vsyncadd %s955, %s963
          %s965 = smul.addr %s22, 128
          %s966 = scalar_lea.hbm %s4, %s965
          %s968 = sshll.u32 %s958, 4
          %s969 = int_to_ptr.vmem [resolvable:$true] %s968
          %971 = dma.vmem_to_hbm [thread:$0]  %s969, 128, %s966, %s955
        $region52: #{attention_forward.1} parent=35 // pred_fallthru
          _
      $region36: #{attention_forward.1} parent=5 // pred_fallthru
        _
      %p972 = scmp.le.s32.totalorder 2, %s17
      // Predicated region
      $region53: #{attention_forward.1} parent=5 // pred_check
        %p973 = pneg %p972
      $region54: #{attention_forward.1} parent=5 // pred_check_branch
        %975 = sbr.rel (%p973) target = $region56
      $region55: #{attention_forward.1} parent=5 // pred_region
        %s976 = ssub.s32 %s17, 2
        // Predicated region
        $region57: #{attention_forward.1} parent=55 // pred_check
          %p977 = pneg %p135
        $region58: #{attention_forward.1} parent=55 // pred_check_branch
          %979 = sbr.rel (%p977) target = $region60
        $region59: #{attention_forward.1} parent=55 // pred_region
          %s980 = sand.u32 %s120, 1
          %s981 = scalar_lea.sflag [#allocation5], %s980
          %s982 = sand.u32 %s120, 1
          %s983 = smul.addr %s982, 8
          %s984 = scalar_lea.vmem [#allocation9], %s983
          %985 = dma.done %s981, 128
        $region60: #{attention_forward.1} parent=55 // pred_fallthru
          _
      $region56: #{attention_forward.1} parent=5 // pred_fallthru
        _
    $region6: #{attention_forward.1} parent=1 // loop_footer
      %s21 = sadd.s32 1, %s17
    $region7: #{attention_forward.1} parent=1 // loop_footer_branch
      %16 = sbr.rel target = $region3
    $region8: #{attention_forward.1} parent=1 // loop_exit
      _
    %986 = vsyncpa [#allocation4], 1
    %s987 = scalar_lea.sflag [#allocation4], 1
    %988 = vsyncpa %s987, 1
    %989 = vsyncpa [#allocation7], 1
    %990 = vsyncpa [#allocation5], 1
    %s991 = scalar_lea.sflag [#allocation5], 1
    %992 = vsyncpa %s991, 1

</llo_original>
